<compile_context>
chip_gen: v7x
topology: tpu7x:2x2x1
jax: 0.10.0
libtpu: 0.0.40
codegen_flags: <defaults>
</compile_context>

<pallas_src>
import functools

import jax
import jax.numpy as jnp
from jax import lax
from jax.experimental import pallas as pl
from jax.experimental.pallas import tpu as pltpu


def _round_up(x, m):
    return ((x + m - 1) // m) * m


def _make_bow_linear_kernel(vocab_size, tk, mask_vocab_tail):
    """Build the kernel body for the given static tiling parameters."""

    def kernel(x_ref, w_ref, b_ref, o_ref, acc_ref):
        # x_ref  : [tb, tk] activation tile (batch rows x vocab chunk)
        # w_ref  : [C,  tk] weight tile, PyTorch layout (classes x vocab chunk)
        # b_ref  : [1,  C ] bias row
        # o_ref  : [tb, C ] output tile
        # acc_ref: [tb, C ] f32 VMEM accumulator, persistent across the K axis
        k = pl.program_id(1)

        @pl.when(k == 0)
        def _():
            acc_ref[...] = jnp.zeros_like(acc_ref)

        x = x_ref[...]
        w = w_ref[...]
        if mask_vocab_tail:
            # The last vocab tile overhangs the array; overhang lanes hold
            # unspecified data.  Zero them in BOTH operands so they contribute
            # exactly 0 (never garbage*garbage) to the accumulator.  For
            # non-last tiles `valid >= tk`, so the mask is all-true — cheap VPU
            # filler under a memory-bound kernel.
            valid = vocab_size - k * tk
            x = jnp.where(lax.broadcasted_iota(jnp.int32, x.shape, 1) < valid, x, 0)
            w = jnp.where(lax.broadcasted_iota(jnp.int32, w.shape, 1) < valid, w, 0)

        # x @ W^T on the MXU: contract the vocab (last) dim of both tiles.
        acc_ref[...] += lax.dot_general(
            x, w,
            dimension_numbers=(((1,), (1,)), ((), ())),
            preferred_element_type=jnp.float32,
        )

        @pl.when(k == pl.num_programs(1) - 1)
        def _():
            o_ref[...] = (acc_ref[...] + b_ref[...]).astype(o_ref.dtype)

    return kernel


@functools.partial(jax.jit, static_argnames=("tk", "tb"))
def bow_classifier_forward(bow_vec, weight, bias, *, tk=2048, tb=128):
    """bow_vec: [..., V]; weight: [C, V] (PyTorch nn.Linear layout); bias: [C]."""
    V = bow_vec.shape[-1]
    C, Vw = weight.shape
    assert Vw == V, (Vw, V)

    lead = bow_vec.shape[:-1]
    x2 = bow_vec.reshape((-1, V))
    B = x2.shape[0]

    # Vocab (reduction) tile: multiple of 128 lanes, capped at tk.
    tkk = min(tk, _round_up(V, 128))
    # Batch tile: multiple of 8 sublanes, capped at tb.
    tbb = min(tb, _round_up(B, 8))

    grid = (pl.cdiv(B, tbb), pl.cdiv(V, tkk))
    mask_vocab_tail = (V % tkk) != 0  # static decision: mask code only if needed

    out = pl.pallas_call(
        _make_bow_linear_kernel(V, tkk, mask_vocab_tail),
        out_shape=jax.ShapeDtypeStruct((B, C), x2.dtype),
        grid_spec=pltpu.PrefetchScalarGridSpec(
            num_scalar_prefetch=0,
            grid=grid,
            in_specs=[
                pl.BlockSpec((tbb, tkk), lambda b, k: (b, k)),  # activations
                pl.BlockSpec((C, tkk), lambda b, k: (0, k)),    # weight [C, V]
                pl.BlockSpec((1, C), lambda b, k: (0, 0)),      # bias
            ],
            out_specs=pl.BlockSpec((tbb, C), lambda b, k: (b, 0)),
            scratch_shapes=[pltpu.VMEM((tbb, C), jnp.float32)],
        ),
        compiler_params=pltpu.CompilerParams(
            dimension_semantics=("parallel", "arbitrary"),
        ),
    )(x2, weight, bias.reshape(1, C))

    return out.reshape(lead + (C,))


if __name__ == "__main__":
    key = jax.random.PRNGKey(0)
    kx1, kw1, kb1, kx2, kw2, kb2 = jax.random.split(key, 6)

    def make_params(k_w, k_b, vocab_size, num_class):
        bound = 1.0 / (vocab_size ** 0.5)
        w = jax.random.uniform(k_w, (num_class, vocab_size),
                               minval=-bound, maxval=bound, dtype=jnp.float32)
        b = jax.random.uniform(k_b, (num_class,),
                               minval=-bound, maxval=bound, dtype=jnp.float32)
        return w, b

    # Case 1: ragged shapes — exercises vocab-tail masking, batch overhang,
    # and a multi-tile reduction (tk=256 -> 4 K-steps over vocab=1000).
    batch, vocab_size, num_class = 6, 1000, 5
    w1, b1 = make_params(kw1, kb1, vocab_size, num_class)
    x1 = jax.random.uniform(kx1, (batch, vocab_size),
                            minval=0.0, maxval=3.0, dtype=jnp.float32)
    out1 = jax.block_until_ready(bow_classifier_forward(x1, w1, b1, tk=256))
    ref1 = x1 @ w1.T + b1
    assert out1.shape == (batch, num_class)
    assert jnp.allclose(out1, ref1, atol=1e-4, rtol=1e-4)

    # Case 2: aligned shapes — exercises the unmasked fast path, single K tile.
    batch2, vocab2, classes2 = 8, 256, 16
    w2, b2 = make_params(kw2, kb2, vocab2, classes2)
    x2 = jax.random.uniform(kx2, (batch2, vocab2),
                            minval=0.0, maxval=3.0, dtype=jnp.float32)
    out2 = jax.block_until_ready(bow_classifier_forward(x2, w2, b2))
    ref2 = x2 @ w2.T + b2
    assert out2.shape == (batch2, classes2)
    assert jnp.allclose(out2, ref2, atol=1e-4, rtol=1e-4)

    print("KERNEL_OK")
</pallas_src>

<mosaic_0001>
module attributes {stable_mosaic.version = 11 : i64} {
  func.func @kernel(%arg0: i32, %arg1: i32, %arg2: memref<8x256xf32, #tpu.memory_space<vmem>>, %arg3: memref<5x256xf32, #tpu.memory_space<vmem>>, %arg4: memref<1x5xf32, #tpu.memory_space<vmem>>, %arg5: memref<8x5xf32, #tpu.memory_space<vmem>>, %arg6: memref<8x5xf32, #tpu.memory_space<vmem>>) attributes {dimension_semantics = [#tpu.dimension_semantics<parallel>, #tpu.dimension_semantics<arbitrary>], iteration_bounds = array<i64: 1, 4>, scalar_prefetch = 0 : i64, scratch_operands = 1 : i64, tpu.core_type = #tpu.core_type<tc>, window_params = [{transform_indices = @transform_0, window_bounds = array<i64: 8, 256>}, {transform_indices = @transform_1, window_bounds = array<i64: 5, 256>}, {pipeline_mode = #tpu.pipeline_mode<synchronous>, transform_indices = @transform_2, window_bounds = array<i64: 1, 5>}, {transform_indices = @transform_3, window_bounds = array<i64: 8, 5>}]} {
    %c0_i32 = arith.constant 0 : i32
    %0 = arith.cmpi eq, %arg1, %c0_i32 : i32
    %1 = arith.extui %0 : i1 to i32
    %c0_i32_0 = arith.constant 0 : i32
    %2 = arith.cmpi ne, %1, %c0_i32_0 : i32
    scf.if %2 {
      %cst_11 = arith.constant 0.000000e+00 : f32
      %26 = vector.broadcast %cst_11 : f32 to vector<8x5xf32>
      %c0_12 = arith.constant 0 : index
      %c0_13 = arith.constant 0 : index
      %27 = vector.load %arg6[%c0_12, %c0_13] : memref<8x5xf32, #tpu.memory_space<vmem>>, vector<8x5xf32>
      tpu.vector_store %arg6[%c0_12, %c0_13], %26 {strides = array<i32>} : memref<8x5xf32, #tpu.memory_space<vmem>>, vector<8x5xf32>,
    } else {
    }
    %c0 = arith.constant 0 : index
    %c0_1 = arith.constant 0 : index
    %3 = vector.load %arg2[%c0, %c0_1] : memref<8x256xf32, #tpu.memory_space<vmem>>, vector<8x256xf32>
    %c0_2 = arith.constant 0 : index
    %c0_3 = arith.constant 0 : index
    %4 = vector.load %arg3[%c0_2, %c0_3] : memref<5x256xf32, #tpu.memory_space<vmem>>, vector<5x256xf32>
    %c256_i32 = arith.constant 256 : i32
    %5 = arith.muli %arg1, %c256_i32 : i32
    %c1000_i32 = arith.constant 1000 : i32
    %6 = arith.subi %c1000_i32, %5 : i32
    %7 = tpu.iota {dimensions = array<i32: 1>} : vector<8x256xi32>
    %8 = vector.broadcast %6 : i32 to vector<8x256xi32>
    %9 = arith.cmpi slt, %7, %8 : vector<8x256xi32>
    %c0_i32_4 = arith.constant 0 : i32
    %10 = arith.sitofp %c0_i32_4 : i32 to f32
    %11 = vector.broadcast %10 : f32 to vector<8x256xf32>
    %12 = arith.select %9, %3, %11 : vector<8x256xi1>, vector<8x256xf32>
    %13 = tpu.iota {dimensions = array<i32: 1>} : vector<5x256xi32>
    %14 = vector.broadcast %6 : i32 to vector<5x256xi32>
    %15 = arith.cmpi slt, %13, %14 : vector<5x256xi32>
    %c0_i32_5 = arith.constant 0 : i32
    %16 = arith.sitofp %c0_i32_5 : i32 to f32
    %17 = vector.broadcast %16 : f32 to vector<5x256xf32>
    %18 = arith.select %15, %4, %17 : vector<5x256xi1>, vector<5x256xf32>
    %c0_6 = arith.constant 0 : index
    %c0_7 = arith.constant 0 : index
    %19 = vector.load %arg6[%c0_6, %c0_7] : memref<8x5xf32, #tpu.memory_space<vmem>>, vector<8x5xf32>
    %cst = arith.constant dense<0.000000e+00> : vector<8x5xf32>
    %20 = tpu.matmul %12, %18, %cst {dimension_numbers = #tpu.dot_dimension_numbers<[1], [1], [0], [0], [0, 0, 1, 0], [], []>} : vector<8x256xf32>, vector<5x256xf32>, vector<8x5xf32> -> vector<8x5xf32>
    %21 = arith.addf %19, %20 : vector<8x5xf32>
    %c0_8 = arith.constant 0 : index
    %c0_9 = arith.constant 0 : index
    %22 = vector.load %arg6[%c0_8, %c0_9] : memref<8x5xf32, #tpu.memory_space<vmem>>, vector<8x5xf32>
    tpu.vector_store %arg6[%c0_8, %c0_9], %21 {strides = array<i32>} : memref<8x5xf32, #tpu.memory_space<vmem>>, vector<8x5xf32>,
    %c3_i32 = arith.constant 3 : i32
    %23 = arith.cmpi eq, %arg1, %c3_i32 : i32
    %24 = arith.extui %23 : i1 to i32
    %c0_i32_10 = arith.constant 0 : i32
    %25 = arith.cmpi ne, %24, %c0_i32_10 : i32
    scf.if %25 {
      %c0_11 = arith.constant 0 : index
      %c0_12 = arith.constant 0 : index
      %26 = vector.load %arg6[%c0_11, %c0_12] : memref<8x5xf32, #tpu.memory_space<vmem>>, vector<8x5xf32>
      %c0_13 = arith.constant 0 : index
      %c0_14 = arith.constant 0 : index
      %27 = vector.load %arg4[%c0_13, %c0_14] : memref<1x5xf32, #tpu.memory_space<vmem>>, vector<1x5xf32>
      %28 = vector.broadcast %27 : vector<1x5xf32> to vector<8x5xf32>
      %29 = arith.addf %26, %28 : vector<8x5xf32>
      %c0_15 = arith.constant 0 : index
      %c0_16 = arith.constant 0 : index
      %30 = vector.load %arg5[%c0_15, %c0_16] : memref<8x5xf32, #tpu.memory_space<vmem>>, vector<8x5xf32>
      tpu.vector_store %arg5[%c0_15, %c0_16], %29 {strides = array<i32>} : memref<8x5xf32, #tpu.memory_space<vmem>>, vector<8x5xf32>,
    } else {
    }
    return
  }
  func.func @transform_0(%arg0: i32, %arg1: i32) -> (i32, i32) {
    %c0_i32 = arith.constant 0 : i32
    return %arg0, %arg1 : i32, i32
  }
  func.func @transform_1(%arg0: i32, %arg1: i32) -> (i32, i32) {
    %c0_i32 = arith.constant 0 : i32
    %c0_i32_0 = arith.constant 0 : i32
    return %c0_i32, %arg1 : i32, i32
  }
  func.func @transform_2(%arg0: i32, %arg1: i32) -> (i32, i32) {
    %c0_i32 = arith.constant 0 : i32
    %c0_i32_0 = arith.constant 0 : i32
    %c0_i32_1 = arith.constant 0 : i32
    return %c0_i32, %c0_i32_0 : i32, i32
  }
  func.func @transform_3(%arg0: i32, %arg1: i32) -> (i32, i32) {
    %c0_i32 = arith.constant 0 : i32
    %c0_i32_0 = arith.constant 0 : i32
    return %arg0, %c0_i32 : i32, i32
  }
}

</mosaic_0001>

<llo_original>
// kernel: bow_classifier_forward.1
$region0: #{bow_classifier_forward.1}
  #allocation0 [shape = 'u32[]', space=smem, size = 0x4, offset = 0x4, fixed_abs, tag = 'smem constant byte address 0x4 - core index']
  #allocation1 [shape = 'u32[144,128]{1,0:T(1,128)}', space=vmem, size = 0x12000, scoped, tag = 'internal scratch']
  #allocation2 [shape = 'f32[8,5]{1,0:T(8,128)}', space=vmem, size = 0x1000, scoped, tag = 'scratch operand']
  %s0 = inlined_call_operand.hbm [shape: f32[6,1000], index: 0, kind: input, shape index: {}]
  %s1 = inlined_call_operand.hbm [shape: f32[5,1000], index: 1, kind: input, shape index: {}]
  %s2 = inlined_call_operand.vmem [shape: f32[1,5], index: 2, kind: input, shape index: {}]
  %s3 = inlined_call_operand.hbm [shape: f32[6,5], index: 3, kind: output, shape index: {}]
  %s4 = sld [smem:[#allocation0]]
  $region61: #{bow_classifier_forward.1} parent=0
    _
  %s6 = ssub.s32 1, %s4
  %s7 = scalar_select 0, %s6, %s4
  $region1: #{bow_classifier_forward.1} parent=0
    #allocation3 [shape = 'u8[16384]{0}', space=vmem, size = 0x4000, scoped, tag = 'input window, operand 0']
    #allocation4 [shape = 's32[2]{0}', space=sflag, size = 0x8, scoped, tag = 'scoped memory for bow_classifier_forward.1']
    #allocation5 [shape = 's32[2]{0}', space=sflag, size = 0x8, scoped, tag = 'scoped memory for bow_classifier_forward.1']
    #allocation6 [shape = 'u8[16384]{0}', space=vmem, size = 0x4000, scoped, tag = 'input window, operand 1']
    #allocation7 [shape = 's32[2]{0}', space=sflag, size = 0x8, scoped, tag = 'scoped memory for bow_classifier_forward.1']
    #allocation8 [shape = 'u8[4096]{0}', space=vmem, size = 0x1000, scoped, tag = 'output window, operand 0, single buffered']
    %8 = vsyncpa [#allocation4], 0
    %s9 = scalar_lea.sflag [#allocation4], 1
    %10 = vsyncpa %s9, 0
    %11 = vsyncpa [#allocation7], 0
    %s12 = scalar_lea.sflag [#allocation7], 1
    %13 = vsyncpa %s12, 0
    %14 = vsyncpa [#allocation5], 0
    loop: start=0, step=1, limit=6
    $region2: #{bow_classifier_forward.1} parent=1 // loop_pre_header
      _
    $region3: #{bow_classifier_forward.1} parent=1 // loop_header
      %s16 = sphi 0, %s20
      %p17 = scmp.ge.s32.totalorder %s16, 6
      %s23 = sphi 0, %s35
      %s24 = sphi 0, %s31
      %s25 = sphi 0, %s23
      %s26 = sphi 0, %s24
      %s27 = sphi 0, %s25
      %s28 = sphi 0, %s26
      %s40 = sphi 0, %s42
      %s43 = sphi 0, %s40
      %s44 = sphi 0, %s43
      %s60 = sphi 0, %s44
      %s66 = sphi 0, %s68
      %s69 = sphi 0, %s66
      %s70 = sphi 0, %s69
      %s86 = sphi 0, %s70
      %s90 = sphi 0, %s90
      %s92 = sphi 0, %s90
      %s93 = sphi 0, %s92
      %s107 = sphi 0, %s93
      %s113 = sphi 0, %s115
      %s116 = sphi 0, %s113
      %s117 = sphi 0, %s116
      %s133 = sphi 0, %s117
    $region4: #{bow_classifier_forward.1} parent=1 // loop_header_branch
      %19 = sbr.rel (%p17) target = $region8
    $region5: #{bow_classifier_forward.1} parent=1 // loop_body
      %s21 = ssub.s32 %s16, 1
      %s22 = ssub.s32 %s16, 2
      %s29 = sadd.s32 1, %s24
      %p30 = scmp.ge.s32.totalorder %s29, 4
      %s31 = scalar_select %p30, 0, %s29
      %s32 = sadd.s32 1, %s23
      %s33 = scalar_select %p30, %s32, %s23
      %p34 = scmp.ge.s32.totalorder %s33, 1
      %s35 = scalar_select %p34, 0, %s33
      %s36 = ssub.s32 %s23, %s35
      %s37 = ssub.s32 %s24, %s31
      %s38 = sor.u32 %s36, %s37
      %p39 = scmp.eq.s32.totalorder %s38, 0
      %s41 = sadd.s32 %s40, 1
      %s42 = scalar_select %p39, %s40, %s41
      %p45 = pneg %p39
      %p46 = scmp.eq.s32.totalorder %s16, 3
      %p47 = por %p45, %p46
      %p48 = scmp.ne.s32.totalorder %s40, %s43
      %p49 = scmp.eq.s32.totalorder %s16, 0
      %p50 = por %p48, %p49
      %p51 = scmp.ne.s32.totalorder %s40, %s43
      %p52 = scmp.eq.s32.totalorder %s21, 3
      %p53 = por %p51, %p52
      %p54 = scmp.ne.s32.totalorder %s43, %s44
      %p55 = scmp.eq.s32.totalorder %s21, 0
      %p56 = por %p54, %p55
      %p57 = scmp.ne.s32.totalorder %s43, %s44
      %p58 = scmp.eq.s32.totalorder %s22, 3
      %p59 = por %p57, %p58
      %p61 = scmp.ne.s32.totalorder %s44, %s60
      %p62 = scmp.eq.s32.totalorder %s22, 0
      %p63 = por %p61, %p62
      %s64 = ssub.s32 %s24, %s31
      %p65 = scmp.eq.s32.totalorder %s64, 0
      %s67 = sadd.s32 %s66, 1
      %s68 = scalar_select %p65, %s66, %s67
      %p71 = pneg %p65
      %p72 = scmp.eq.s32.totalorder %s16, 3
      %p73 = por %p71, %p72
      %p74 = scmp.ne.s32.totalorder %s66, %s69
      %p75 = scmp.eq.s32.totalorder %s16, 0
      %p76 = por %p74, %p75
      %p77 = scmp.ne.s32.totalorder %s66, %s69
      %p78 = scmp.eq.s32.totalorder %s21, 3
      %p79 = por %p77, %p78
      %p80 = scmp.ne.s32.totalorder %s69, %s70
      %p81 = scmp.eq.s32.totalorder %s21, 0
      %p82 = por %p80, %p81
      %p83 = scmp.ne.s32.totalorder %s69, %s70
      %p84 = scmp.eq.s32.totalorder %s22, 3
      %p85 = por %p83, %p84
      %p87 = scmp.ne.s32.totalorder %s70, %s86
      %p88 = scmp.eq.s32.totalorder %s22, 0
      %p89 = por %p87, %p88
      %s91 = sadd.s32 %s90, 1
      %p94 = scmp.eq.s32.totalorder %s16, 3
      %p95 = scmp.ne.s32.totalorder %s90, %s92
      %p96 = scmp.eq.s32.totalorder %s16, 0
      %p97 = por %p95, %p96
      %p98 = scmp.ne.s32.totalorder %s90, %s92
      %p99 = scmp.eq.s32.totalorder %s21, 3
      %p100 = por %p98, %p99
      %p101 = scmp.ne.s32.totalorder %s92, %s93
      %p102 = scmp.eq.s32.totalorder %s21, 0
      %p103 = por %p101, %p102
      %p104 = scmp.ne.s32.totalorder %s92, %s93
      %p105 = scmp.eq.s32.totalorder %s22, 3
      %p106 = por %p104, %p105
      %p108 = scmp.ne.s32.totalorder %s93, %s107
      %p109 = scmp.eq.s32.totalorder %s22, 0
      %p110 = por %p108, %p109
      %s111 = ssub.s32 %s23, %s35
      %p112 = scmp.eq.s32.totalorder %s111, 0
      %s114 = sadd.s32 %s113, 1
      %s115 = scalar_select %p112, %s113, %s114
      %p118 = pneg %p112
      %p119 = scmp.eq.s32.totalorder %s16, 3
      %p120 = por %p118, %p119
      %p121 = scmp.ne.s32.totalorder %s113, %s116
      %p122 = scmp.eq.s32.totalorder %s16, 0
      %p123 = por %p121, %p122
      %p124 = scmp.ne.s32.totalorder %s113, %s116
      %p125 = scmp.eq.s32.totalorder %s21, 3
      %p126 = por %p124, %p125
      %p127 = scmp.ne.s32.totalorder %s116, %s117
      %p128 = scmp.eq.s32.totalorder %s21, 0
      %p129 = por %p127, %p128
      %p130 = scmp.ne.s32.totalorder %s116, %s117
      %p131 = scmp.eq.s32.totalorder %s22, 3
      %p132 = por %p130, %p131
      %p134 = scmp.ne.s32.totalorder %s117, %s133
      %p135 = scmp.eq.s32.totalorder %s22, 0
      %p136 = por %p134, %p135
      %p137 = scmp.le.s32.totalorder 1, %s16
      %p138 = scmp.lt.s32.totalorder %s16, 5
      %p139 = pnand %p137, %p138
      %p140 = pneg %p139
      // Predicated region
      $region9: #{bow_classifier_forward.1} parent=5 // pred_check
        _
      $region10: #{bow_classifier_forward.1} parent=5 // pred_check_branch
        %142 = sbr.rel (%p139) target = $region12
      $region11: #{bow_classifier_forward.1} parent=5 // pred_region
        %s143 = ssub.s32 %s16, 1
        // Predicated region
        $region13: #{bow_classifier_forward.1} parent=11 // pred_check
          %p144 = pneg %p103
        $region14: #{bow_classifier_forward.1} parent=11 // pred_check_branch
          %146 = sbr.rel (%p144) target = $region16
        $region15: #{bow_classifier_forward.1} parent=11 // pred_region
          _
        $region16: #{bow_classifier_forward.1} parent=11 // pred_fallthru
          _
      $region12: #{bow_classifier_forward.1} parent=5 // pred_fallthru
        _
      %p147 = scmp.lt.s32.totalorder %s16, 4
      // Predicated region
      $region17: #{bow_classifier_forward.1} parent=5 // pred_check
        %p148 = pneg %p147
      $region18: #{bow_classifier_forward.1} parent=5 // pred_check_branch
        %150 = sbr.rel (%p148) target = $region20
      $region19: #{bow_classifier_forward.1} parent=5 // pred_region
        // Predicated region
        $region21: #{bow_classifier_forward.1} parent=19 // pred_check
          %p151 = pneg %p50
        $region22: #{bow_classifier_forward.1} parent=19 // pred_check_branch
          %153 = sbr.rel (%p151) target = $region24
        $region23: #{bow_classifier_forward.1} parent=19 // pred_region
          %s154 = sand.u32 %s40, 1
          %s155 = scalar_lea.sflag [#allocation4], %s154
          %s156 = sand.u32 %s40, 1
          %s157 = smul.addr %s156, 16
          %s158 = scalar_lea.vmem [#allocation3], %s157
          %s159 = smul.u32 2, %s24
          %s161 = ssub.s32 256, 256
          %162 = vsyncadd %s155, %s161
          %s163 = smul.addr %s23, 8
          %s164 = sadd.s32 %s159, %s163
          %s165 = smul.addr %s164, 128
          %s166 = scalar_lea.hbm %s0, %s165
          %s168 = sshll.u32 %s158, 4
          %s169 = int_to_ptr.vmem [resolvable:$true] %s168
          %171 = dma.hbm_to_vmem [thread:$0]  %s166, 256, %s169, %s155
        $region24: #{bow_classifier_forward.1} parent=19 // pred_fallthru
          _
        // Predicated region
        $region25: #{bow_classifier_forward.1} parent=19 // pred_check
          %p172 = pneg %p76
        $region26: #{bow_classifier_forward.1} parent=19 // pred_check_branch
          %174 = sbr.rel (%p172) target = $region28
        $region27: #{bow_classifier_forward.1} parent=19 // pred_region
          %s175 = sand.u32 %s66, 1
          %s176 = scalar_lea.sflag [#allocation7], %s175
          %s177 = sand.u32 %s66, 1
          %s178 = smul.addr %s177, 16
          %s179 = scalar_lea.vmem [#allocation6], %s178
          %s180 = smul.u32 2, %s24
          %s182 = ssub.s32 256, 256
          %183 = vsyncadd %s176, %s182
          %s184 = smul.addr %s180, 128
          %s185 = scalar_lea.hbm %s1, %s184
          %s187 = sshll.u32 %s179, 4
          %s188 = int_to_ptr.vmem [resolvable:$true] %s187
          %190 = dma.hbm_to_vmem [thread:$0]  %s185, 256, %s188, %s176
        $region28: #{bow_classifier_forward.1} parent=19 // pred_fallthru
          _
      $region20: #{bow_classifier_forward.1} parent=5 // pred_fallthru
        _
      %p191 = scmp.le.s32.totalorder 1, %s16
      %p192 = scmp.lt.s32.totalorder %s16, 5
      %p193 = pnand %p191, %p192
      %p194 = pneg %p193
      // Predicated region
      $region29: #{bow_classifier_forward.1} parent=5 // pred_check
        _
      $region30: #{bow_classifier_forward.1} parent=5 // pred_check_branch
        %196 = sbr.rel (%p193) target = $region32
      $region31: #{bow_classifier_forward.1} parent=5 // pred_region
        %s197 = ssub.s32 %s16, 1
        %s198 = sand.u32 %s43, 1
        %s199 = scalar_lea.sflag [#allocation4], %s198
        %s200 = sand.u32 %s43, 1
        %s201 = smul.addr %s200, 16
        %s202 = scalar_lea.vmem [#allocation3], %s201
        // Predicated region
        $region33: #{bow_classifier_forward.1} parent=31 // pred_check
          %p203 = pneg %p56
        $region34: #{bow_classifier_forward.1} parent=31 // pred_check_branch
          %205 = sbr.rel (%p203) target = $region36
        $region35: #{bow_classifier_forward.1} parent=31 // pred_region
          %206 = dma.done %s199, 256
        $region36: #{bow_classifier_forward.1} parent=31 // pred_fallthru
          _
        %s207 = sand.u32 %s69, 1
        %s208 = scalar_lea.sflag [#allocation7], %s207
        %s209 = sand.u32 %s69, 1
        %s210 = smul.addr %s209, 16
        %s211 = scalar_lea.vmem [#allocation6], %s210
        // Predicated region
        $region37: #{bow_classifier_forward.1} parent=31 // pred_check
          %p212 = pneg %p82
        $region38: #{bow_classifier_forward.1} parent=31 // pred_check_branch
          %214 = sbr.rel (%p212) target = $region40
        $region39: #{bow_classifier_forward.1} parent=31 // pred_region
          %215 = dma.done %s208, 256
        $region40: #{bow_classifier_forward.1} parent=31 // pred_fallthru
          _
        %s216 = sand.u32 %s43, 1
        %s217 = scalar_lea.sflag [#allocation4], %s216
        %s218 = sand.u32 %s43, 1
        %s219 = smul.addr %s218, 16
        %s220 = scalar_lea.vmem [#allocation3], %s219
        %p221 = pneg %p56
        %p222 = pneg %p53
        %s223 = sand.u32 %s69, 1
        %s224 = scalar_lea.sflag [#allocation7], %s223
        %s225 = sand.u32 %s69, 1
        %s226 = smul.addr %s225, 16
        %s227 = scalar_lea.vmem [#allocation6], %s226
        %p228 = pneg %p82
        %p229 = pneg %p79
        %p230 = pneg %p103
        %p231 = pneg %p100
        %p232 = pneg %p129
        %p233 = pneg %p126
        %s234 = smul.u32 2, %s26
        %s235 = smul.u32 2, %s26
        %p236 = scmp.eq.s32.totalorder %s26, 0
        // Predicated region
        $region41: #{bow_classifier_forward.1} parent=31 // pred_check
          %p237 = pneg %p236
        $region42: #{bow_classifier_forward.1} parent=31 // pred_check_branch
          %239 = sbr.rel (%p237) target = $region44
        $region43: #{bow_classifier_forward.1} parent=31 // pred_region
          %vm240 = vcmask 39936
          %241 = vst.msk [vmem:[#allocation2] sm:$0xff] %vm240, 0.0
        $region44: #{bow_classifier_forward.1} parent=31 // pred_fallthru
          _
        %v242 = vld [vmem:[%s202] sm:$0xff]
        %v243 = vld [vmem:[%s202 + $0x8] sm:$0xff]
        %v244 = vld [vmem:[%s211] sm:$0x1f]
        %v245 = vld [vmem:[%s211 + $0x8] sm:$0x1f]
        %s246 = smul.u32 %s26, 256
        %s247 = ssub.s32 1000, %s246
        %v248 = vlaneseq
        %v249 = vand.u32 %v248, 127
        %v250 = vadd.s32 %v249, 128
        %v251 = vstv %s247
        %vm252 = vcmp.lt.s32.totalorder %v249, %v251
        %vm253 = vcmp.lt.s32.totalorder %v250, %v251
        %v254 = vsel %vm252, %v242, 0.0
        %v255 = vsel %vm253, %v243, 0.0
        %v256 = vsel %vm252, %v244, 0.0
        %v257 = vsel %vm253, %v245, 0.0
        %v258 = vld [vmem:[#allocation2] sm:$0xff]
        %259 = vmatprep.subr.mxu0 %v257
        %260 = vmatpush1.xpose.msra.mxu0 %v256
        %261 = vmatprep.subr.mxu0 0.0
        %262 = vmatpush1.xpose.msra.mxu0 0.0
        %263 = vmatprep.subr.mxu0 0.0
        %264 = vmatpush1.xpose.msra.mxu0 0.0
        %265 = vmatprep.subr.mxu0 0.0
        %266 = vmatpush1.xpose.msra.mxu0 0.0
        %267 = vmatprep.subr.mxu0 0.0
        %268 = vmatpush1.xpose.msra.mxu0 0.0
        %269 = vmatprep.subr.mxu0 0.0
        %270 = vmatpush1.xpose.msra.mxu0 0.0
        %271 = vmatprep.subr.mxu0 0.0
        %272 = vmatpush1.xpose.msra.mxu0 0.0
        %273 = vmatprep.subr.mxu0 0.0
        %274 = vmatpush1.xpose.msra.mxu0 0.0
        %275 = vmatprep.subr.mxu0 0.0
        %276 = vmatpush1.xpose.msra.mxu0 0.0
        %277 = vmatprep.subr.mxu0 0.0
        %278 = vmatpush1.xpose.msra.mxu0 0.0
        %279 = vmatprep.subr.mxu0 0.0
        %280 = vmatpush1.xpose.msra.mxu0 0.0
        %281 = vmatprep.subr.mxu0 0.0
        %282 = vmatpush1.xpose.msra.mxu0 0.0
        %283 = vmatprep.subr.mxu0 0.0
        %284 = vmatpush1.xpose.msra.mxu0 0.0
        %285 = vmatprep.subr.mxu0 0.0
        %286 = vmatpush1.xpose.msra.mxu0 0.0
        %287 = vmatprep.subr.mxu0 0.0
        %288 = vmatpush1.xpose.msra.mxu0 0.0
        %289 = vmatprep.subr.mxu0 0.0
        %290 = vmatpush1.xpose.msra.mxu0 0.0
        %291 = vmatprep.subr.mxu0 0.0
        %292 = vmatpush1.xpose.msra.mxu0 0.0
        %293 = vmatprep.subr.mxu0 0.0
        %294 = vmatpush1.xpose.msra.mxu0 0.0
        %295 = vmatprep.subr.mxu0 0.0
        %296 = vmatpush1.xpose.msra.mxu0 0.0
        %297 = vmatprep.subr.mxu0 0.0
        %298 = vmatpush1.xpose.msra.mxu0 0.0
        %299 = vmatprep.subr.mxu0 0.0
        %300 = vmatpush1.xpose.msra.mxu0 0.0
        %301 = vmatprep.subr.mxu0 0.0
        %302 = vmatpush1.xpose.msra.mxu0 0.0
        %303 = vmatprep.subr.mxu0 0.0
        %304 = vmatpush1.xpose.msra.mxu0 0.0
        %305 = vmatprep.subr.mxu0 0.0
        %306 = vmatpush1.xpose.msra.mxu0 0.0
        %307 = vmatprep.subr.mxu0 0.0
        %308 = vmatpush1.xpose.msra.mxu0 0.0
        %309 = vmatprep.subr.mxu0 0.0
        %310 = vmatpush1.xpose.msra.mxu0 0.0
        %311 = vmatprep.subr.mxu0 0.0
        %312 = vmatpush1.xpose.msra.mxu0 0.0
        %313 = vmatprep.subr.mxu0 0.0
        %314 = vmatpush1.xpose.msra.mxu0 0.0
        %315 = vmatprep.subr.mxu0 0.0
        %316 = vmatpush1.xpose.msra.mxu0 0.0
        %317 = vmatprep.subr.mxu0 0.0
        %318 = vmatpush1.xpose.msra.mxu0 0.0
        %319 = vmatprep.subr.mxu0 0.0
        %320 = vmatpush1.xpose.msra.mxu0 0.0
        %321 = vmatprep.subr.mxu0 0.0
        %322 = vmatpush1.xpose.msra.mxu0 0.0
        %323 = vmatprep.mubr.f32.mxu0 %v255
        %324 = vmatmul.mubr.f32.gmra.mrb[0].mxu0 %v254
        %v325 = vpop.f32.mrb[0].mxu0
        %v326 = vadd.f32 0.0, %v325
        %v327 = vpop.f32.mrb[0].mxu0
        %328 = vdwg.mxu0
        %v329 = vadd.f32 %v258, %v326
        %vm330 = vcmask 39936
        %331 = vst.msk [vmem:[#allocation2] sm:$0xff] %vm330, %v329
        %p332 = scmp.eq.s32.totalorder %s26, 3
        // Predicated region
        $region45: #{bow_classifier_forward.1} parent=31 // pred_check
          %p333 = pneg %p332
        $region46: #{bow_classifier_forward.1} parent=31 // pred_check_branch
          %335 = sbr.rel (%p333) target = $region48
        $region47: #{bow_classifier_forward.1} parent=31 // pred_region
          %v336 = vld [vmem:[#allocation2] sm:$0xff]
          %v337 = vld [vmem:[%s2] sm:$0x1]
          %v339 = vlaneseq
          %v340 = vshrl.u32 %v339, 7
          %v341 = vsub.s32 0, %v340
          %v342 = vrot.slane %v337, %v341
          %v344 = vadd.f32 %v336, %v342
          %345 = vst.msk [vmem:[#allocation8] sm:$0xff] %vm330, %v344
        $region48: #{bow_classifier_forward.1} parent=31 // pred_fallthru
          _
        // Predicated region
        $region49: #{bow_classifier_forward.1} parent=31 // pred_check
          %p346 = pneg %p126
        $region50: #{bow_classifier_forward.1} parent=31 // pred_check_branch
          %348 = sbr.rel (%p346) target = $region52
        $region51: #{bow_classifier_forward.1} parent=31 // pred_region
          %s350 = ssub.s32 128, 128
          %351 = vsyncadd [#allocation5], %s350
          %s352 = smul.addr %s25, 128
          %s353 = scalar_lea.hbm %s3, %s352
          %s355 = sshll.u32 [#allocation8], 4
          %s356 = int_to_ptr.vmem [resolvable:$true] %s355
          %358 = dma.vmem_to_hbm [thread:$0]  %s356, 128, %s353, [#allocation5]
        $region52: #{bow_classifier_forward.1} parent=31 // pred_fallthru
          _
        // Predicated region
        $region53: #{bow_classifier_forward.1} parent=31 // pred_check
          %p359 = pneg %p126
        $region54: #{bow_classifier_forward.1} parent=31 // pred_check_branch
          %361 = sbr.rel (%p359) target = $region56
        $region55: #{bow_classifier_forward.1} parent=31 // pred_region
          %362 = dma.done [#allocation5], 128
        $region56: #{bow_classifier_forward.1} parent=31 // pred_fallthru
          _
      $region32: #{bow_classifier_forward.1} parent=5 // pred_fallthru
        _
      %p363 = scmp.le.s32.totalorder 2, %s16
      // Predicated region
      $region57: #{bow_classifier_forward.1} parent=5 // pred_check
        %p364 = pneg %p363
      $region58: #{bow_classifier_forward.1} parent=5 // pred_check_branch
        %366 = sbr.rel (%p364) target = $region60
      $region59: #{bow_classifier_forward.1} parent=5 // pred_region
        %s367 = ssub.s32 %s16, 2
      $region60: #{bow_classifier_forward.1} parent=5 // pred_fallthru
        _
    $region6: #{bow_classifier_forward.1} parent=1 // loop_footer
      %s20 = sadd.s32 1, %s16
    $region7: #{bow_classifier_forward.1} parent=1 // loop_footer_branch
      %15 = sbr.rel target = $region3
    $region8: #{bow_classifier_forward.1} parent=1 // loop_exit
      _
    %368 = vsyncpa [#allocation4], 1
    %s369 = scalar_lea.sflag [#allocation4], 1
    %370 = vsyncpa %s369, 1
    %371 = vsyncpa [#allocation7], 1
    %s372 = scalar_lea.sflag [#allocation7], 1
    %373 = vsyncpa %s372, 1
    %374 = vsyncpa [#allocation5], 1
    %s375 = scalar_lea.sflag [#allocation5], 1
    %376 = vsyncpa %s375, 1

</llo_original>
